<compile_context>
chip_gen: v6e
topology: v6e:2x2x1
jax: 0.10.0
libtpu: 0.0.40
codegen_flags: <defaults>
</compile_context>

<pallas_src>
import functools

import jax
import jax.numpy as jnp
from jax.experimental import pallas as pl
from jax.experimental.pallas import tpu as pltpu

LANES = 128
DEFAULT_BLOCK_ROWS = 2048  # 2048 * 128 * 4B = 1 MiB per f32 input block


def _round_up(n, m):
    return ((n + m - 1) // m) * m


def _bce_loss_f32(x, y):
    # Numerically stable BCE-with-logits (matches PyTorch):
    #   loss = max(x, 0) - x*y + log1p(exp(-|x|))
    return jnp.maximum(x, 0.0) - x * y + jnp.log1p(jnp.exp(-jnp.abs(x)))


def _bce_kernel(x_ref, y_ref, o_ref, acc_ref, *, rows, block_rows, needs_mask):
    i = pl.program_id(0)

    @pl.when(i == 0)
    def _():
        acc_ref[...] = jnp.zeros_like(acc_ref)

    x = x_ref[...].astype(jnp.float32)
    y = y_ref[...].astype(jnp.float32)
    loss = _bce_loss_f32(x, y)

    if needs_mask:
        # Only the last (ragged) block has rows past `rows`; elsewhere the
        # compare is all-true.  Row-granular bound only (lanes are already
        # aligned by the wrapper), so no 32-bit flat-index overflow risk.
        valid = rows - i * block_rows
        row_ids = jax.lax.broadcasted_iota(jnp.int32, loss.shape, 0)
        loss = jnp.where(row_ids < valid, loss, 0.0)

    # Per-step accumulation into a vreg-shaped buffer: pure VPU adds that
    # hide under the DMA.  The expensive cross-lane reduce happens once below.
    acc_ref[...] += loss.reshape(-1, 8, LANES).sum(axis=0)

    @pl.when(i == pl.num_programs(0) - 1)
    def _():
        o_ref[...] = jnp.sum(acc_ref[...], keepdims=True)


def bce_with_logits_mean(x, y, *, block_rows=DEFAULT_BLOCK_ROWS):
    """Mean binary cross-entropy with logits over all elements of x/y."""
    assert x.shape == y.shape, "logits and targets must have identical shapes"
    total = int(x.size)
    assert total > 0, "empty input"

    xf = x.reshape(-1)
    yf = y.reshape(-1)

    lane_total = (total // LANES) * LANES

    # Sub-128-element tail: handled with plain jnp (tiny), avoids padding the
    # whole array in HBM just to make it lane-aligned.
    if lane_total < total:
        xt = xf[lane_total:].astype(jnp.float32)
        yt = yf[lane_total:].astype(jnp.float32)
        tail_sum = jnp.sum(_bce_loss_f32(xt, yt))
    else:
        tail_sum = jnp.float32(0.0)

    if lane_total == 0:
        # Fewer than 128 elements total: nothing for the kernel to do.
        return tail_sum / jnp.float32(total)

    if lane_total == total:
        x_main, y_main = xf, yf
    else:
        x_main, y_main = xf[:lane_total], yf[:lane_total]

    rows = lane_total // LANES
    x2 = x_main.reshape(rows, LANES)
    y2 = y_main.reshape(rows, LANES)

    # Multiple of 16 keeps sub-32-bit dtypes (e.g. bf16) tiling-legal too,
    # and is capped so small inputs use a single (full-array-ish) block.
    block_rows = max(16, min(block_rows, _round_up(rows, 16)))
    grid = (pl.cdiv(rows, block_rows),)
    needs_mask = (rows % block_rows) != 0

    kernel = functools.partial(
        _bce_kernel, rows=rows, block_rows=block_rows, needs_mask=needs_mask
    )

    main_sum = pl.pallas_call(
        kernel,
        out_shape=jax.ShapeDtypeStruct((1, 1), jnp.float32),
        grid_spec=pltpu.PrefetchScalarGridSpec(
            num_scalar_prefetch=0,
            grid=grid,
            in_specs=[
                pl.BlockSpec((block_rows, LANES), lambda i: (i, 0)),
                pl.BlockSpec((block_rows, LANES), lambda i: (i, 0)),
            ],
            out_specs=pl.BlockSpec((1, 1), lambda i: (0, 0)),
            scratch_shapes=[pltpu.VMEM((8, LANES), jnp.float32)],
        ),
        compiler_params=pltpu.CompilerParams(
            dimension_semantics=("arbitrary",),
        ),
    )(x2, y2)[0, 0]

    # TODO(synk): optional v7x-only 2-TensorCore split (leading 'parallel'
    # grid axis with per-core partial sums) if a single TC can't saturate HBM.
    return (main_sum + tail_sum) / jnp.float32(total)


if __name__ == "__main__":
    key = jax.random.PRNGKey(0)
    kx, ky = jax.random.split(key)

    # NCHW inputs: logits x and targets y in [0, 1].
    x = jax.random.normal(kx, (2, 4, 16, 16), dtype=jnp.float32)
    y = jax.random.uniform(ky, (2, 4, 16, 16), dtype=jnp.float32)

    loss = bce_with_logits_mean(x, y)
    loss = jax.block_until_ready(loss)

    # Pure-JAX reference check.
    ref = jnp.mean(
        jnp.maximum(x, 0.0) - x * y + jnp.log1p(jnp.exp(-jnp.abs(x)))
    )
    assert jnp.allclose(loss, ref, atol=1e-5, rtol=1e-5), (loss, ref)

    print("KERNEL_OK")
</pallas_src>

<mosaic_0001>
module attributes {stable_mosaic.version = 11 : i64} {
  func.func @_bce_kernel(%arg0: i32, %arg1: memref<16x128xf32, #tpu.memory_space<vmem>>, %arg2: memref<16x128xf32, #tpu.memory_space<vmem>>, %arg3: memref<1x1xf32, #tpu.memory_space<vmem>>, %arg4: memref<8x128xf32, #tpu.memory_space<vmem>>) attributes {dimension_semantics = [#tpu.dimension_semantics<arbitrary>], iteration_bounds = array<i64: 1>, scalar_prefetch = 0 : i64, scratch_operands = 1 : i64, tpu.core_type = #tpu.core_type<tc>, window_params = [{transform_indices = @transform_0, window_bounds = array<i64: 16, 128>}, {transform_indices = @transform_1, window_bounds = array<i64: 16, 128>}, {pipeline_mode = #tpu.pipeline_mode<synchronous>, transform_indices = @transform_2, window_bounds = array<i64: 1, 1>}]} {
    %c0_i32 = arith.constant 0 : i32
    %0 = arith.cmpi eq, %arg0, %c0_i32 : i32
    %1 = arith.extui %0 : i1 to i32
    %c0_i32_0 = arith.constant 0 : i32
    %2 = arith.cmpi ne, %1, %c0_i32_0 : i32
    scf.if %2 {
      %cst_12 = arith.constant 0.000000e+00 : f32
      %23 = vector.broadcast %cst_12 : f32 to vector<8x128xf32>
      %c0_13 = arith.constant 0 : index
      %c0_14 = arith.constant 0 : index
      %24 = vector.load %arg4[%c0_13, %c0_14] : memref<8x128xf32, #tpu.memory_space<vmem>>, vector<8x128xf32>
      tpu.vector_store %arg4[%c0_13, %c0_14], %23 {strides = array<i32>} : memref<8x128xf32, #tpu.memory_space<vmem>>, vector<8x128xf32>,
    } else {
    }
    %c0 = arith.constant 0 : index
    %c0_1 = arith.constant 0 : index
    %3 = vector.load %arg1[%c0, %c0_1] : memref<16x128xf32, #tpu.memory_space<vmem>>, vector<16x128xf32>
    %c0_2 = arith.constant 0 : index
    %c0_3 = arith.constant 0 : index
    %4 = vector.load %arg2[%c0_2, %c0_3] : memref<16x128xf32, #tpu.memory_space<vmem>>, vector<16x128xf32>
    %cst = arith.constant 0.000000e+00 : f32
    %5 = vector.broadcast %cst : f32 to vector<16x128xf32>
    %6 = arith.maximumf %3, %5 : vector<16x128xf32>
    %7 = arith.mulf %3, %4 : vector<16x128xf32>
    %8 = arith.subf %6, %7 : vector<16x128xf32>
    %9 = math.absf %3 : vector<16x128xf32>
    %cst_4 = arith.constant 0.000000e+00 : f32
    %10 = vector.broadcast %cst_4 : f32 to vector<16x128xf32>
    %11 = arith.subf %10, %9 : vector<16x128xf32>
    %12 = math.exp %11 : vector<16x128xf32>
    %13 = math.log1p %12 : vector<16x128xf32>
    %14 = arith.addf %8, %13 : vector<16x128xf32>
    %c0_5 = arith.constant 0 : index
    %c0_6 = arith.constant 0 : index
    %15 = vector.load %arg4[%c0_5, %c0_6] : memref<8x128xf32, #tpu.memory_space<vmem>>, vector<8x128xf32>
    %16 = vector.shape_cast %14 : vector<16x128xf32> to vector<2x8x128xf32>
    %cst_7 = arith.constant dense<0.000000e+00> : vector<8x128xf32>
    %17 = vector.multi_reduction <add>, %16, %cst_7 [0] : vector<2x8x128xf32> to vector<8x128xf32>
    %18 = arith.addf %15, %17 : vector<8x128xf32>
    %c0_8 = arith.constant 0 : index
    %c0_9 = arith.constant 0 : index
    %19 = vector.load %arg4[%c0_8, %c0_9] : memref<8x128xf32, #tpu.memory_space<vmem>>, vector<8x128xf32>
    tpu.vector_store %arg4[%c0_8, %c0_9], %18 {strides = array<i32>} : memref<8x128xf32, #tpu.memory_space<vmem>>, vector<8x128xf32>,
    %c0_i32_10 = arith.constant 0 : i32
    %20 = arith.cmpi eq, %arg0, %c0_i32_10 : i32
    %21 = arith.extui %20 : i1 to i32
    %c0_i32_11 = arith.constant 0 : i32
    %22 = arith.cmpi ne, %21, %c0_i32_11 : i32
    scf.if %22 {
      %c0_12 = arith.constant 0 : index
      %c0_13 = arith.constant 0 : index
      %23 = vector.load %arg4[%c0_12, %c0_13] : memref<8x128xf32, #tpu.memory_space<vmem>>, vector<8x128xf32>
      %24 = vector.shape_cast %23 : vector<8x128xf32> to vector<1x8x128xf32>
      %cst_14 = arith.constant dense<0.000000e+00> : vector<1xf32>
      %25 = vector.multi_reduction <add>, %24, %cst_14 [1, 2] : vector<1x8x128xf32> to vector<1xf32>
      %26 = vector.shape_cast %25 : vector<1xf32> to vector<1x1x1xf32>
      %27 = vector.extract %26[0, 0, 0] : f32 from vector<1x1x1xf32>
      %28 = vector.broadcast %27 : f32 to vector<1x1xf32>
      %c0_15 = arith.constant 0 : index
      %c0_16 = arith.constant 0 : index
      %29 = vector.load %arg3[%c0_15, %c0_16] : memref<1x1xf32, #tpu.memory_space<vmem>>, vector<1x1xf32>
      tpu.vector_store %arg3[%c0_15, %c0_16], %28 {strides = array<i32>} : memref<1x1xf32, #tpu.memory_space<vmem>>, vector<1x1xf32>,
    } else {
    }
    return
  }
  func.func @transform_0(%arg0: i32) -> (i32, i32) {
    %c0_i32 = arith.constant 0 : i32
    %c0_i32_0 = arith.constant 0 : i32
    return %arg0, %c0_i32 : i32, i32
  }
  func.func @transform_1(%arg0: i32) -> (i32, i32) {
    %c0_i32 = arith.constant 0 : i32
    %c0_i32_0 = arith.constant 0 : i32
    return %arg0, %c0_i32 : i32, i32
  }
  func.func @transform_2(%arg0: i32) -> (i32, i32) {
    %c0_i32 = arith.constant 0 : i32
    %c0_i32_0 = arith.constant 0 : i32
    %c0_i32_1 = arith.constant 0 : i32
    return %c0_i32, %c0_i32_0 : i32, i32
  }
}

</mosaic_0001>

<llo_original>
// kernel: tpu_custom_call.1
$region0: #{tpu_custom_call.1}
  #allocation0 [shape = 'u32[]', space=smem, size = 0x4, offset = 0x4, fixed_abs, tag = 'smem constant byte address 0x4 - core index']
  #allocation1 [shape = 'u32[144,128]{1,0:T(1,128)}', space=vmem, size = 0x12000, scoped, tag = 'internal scratch']
  #allocation2 [shape = 'f32[8,128]{1,0:T(8,128)}', space=vmem, size = 0x1000, scoped, tag = 'scratch operand']
  %s0 = inlined_call_operand.hbm [shape: f32[16,128], index: 0, kind: input, shape index: {}]
  %s1 = inlined_call_operand.hbm [shape: f32[16,128], index: 1, kind: input, shape index: {}]
  %s2 = inlined_call_operand.hbm [shape: f32[1,1], index: 2, kind: output, shape index: {}]
  %s3 = sld [smem:[#allocation0]]
  $region34: #{tpu_custom_call.1} parent=0
    _
  %s5 = ssub.s32 1, %s3
  %s6 = scalar_select 0, %s5, %s3
  $region1: #{tpu_custom_call.1} parent=0
    #allocation3 [shape = 'u8[8192]{0}', space=vmem, size = 0x2000, scoped, tag = 'input window, operand 0, single buffered']
    #allocation4 [shape = 's32[1]{0}', space=sflag, size = 0x4, scoped, tag = 'scoped memory for tpu_custom_call.1']
    #allocation5 [shape = 's32[1]{0}', space=sflag, size = 0x4, scoped, tag = 'scoped memory for tpu_custom_call.1']
    #allocation6 [shape = 'u8[8192]{0}', space=vmem, size = 0x2000, scoped, tag = 'input window, operand 1, single buffered']
    #allocation7 [shape = 's32[1]{0}', space=sflag, size = 0x4, scoped, tag = 'scoped memory for tpu_custom_call.1']
    #allocation8 [shape = 'u8[512]{0}', space=vmem, size = 0x400, scoped, tag = 'output window, operand 0, single buffered']
    %7 = vsyncpa [#allocation4], 0
    %8 = vsyncpa [#allocation7], 0
    %9 = vsyncpa [#allocation5], 0
    // Predicated region
    $region2: #{tpu_custom_call.1} parent=1 // pred_check
      _
    $region3: #{tpu_custom_call.1} parent=1 // pred_check_branch
      %11 = sbr.rel (0) target = $region5
    $region4: #{tpu_custom_call.1} parent=1 // pred_region
      %s13 = ssub.s32 256, 256
      %14 = vsyncadd [#allocation4], %s13
      %s15 = sshll.u32 [#allocation3], 4
      %s16 = int_to_ptr.vmem [resolvable:$true] %s15
      %21 = dma.hbm_to_vmem [thread:$0]  %s0, 256, %s16, [#allocation4], 128, 128, 8
    $region5: #{tpu_custom_call.1} parent=1 // pred_fallthru
      _
    // Predicated region
    $region6: #{tpu_custom_call.1} parent=1 // pred_check
      _
    $region7: #{tpu_custom_call.1} parent=1 // pred_check_branch
      %23 = sbr.rel (0) target = $region9
    $region8: #{tpu_custom_call.1} parent=1 // pred_region
      %s25 = ssub.s32 256, 256
      %26 = vsyncadd [#allocation7], %s25
      %s27 = sshll.u32 [#allocation6], 4
      %s28 = int_to_ptr.vmem [resolvable:$true] %s27
      %33 = dma.hbm_to_vmem [thread:$0]  %s1, 256, %s28, [#allocation7], 128, 128, 8
    $region9: #{tpu_custom_call.1} parent=1 // pred_fallthru
      _
    // Predicated region
    $region10: #{tpu_custom_call.1} parent=1 // pred_check
      _
    $region11: #{tpu_custom_call.1} parent=1 // pred_check_branch
      %35 = sbr.rel (0) target = $region13
    $region12: #{tpu_custom_call.1} parent=1 // pred_region
      %36 = dma.done [#allocation4], 256
    $region13: #{tpu_custom_call.1} parent=1 // pred_fallthru
      _
    // Predicated region
    $region14: #{tpu_custom_call.1} parent=1 // pred_check
      _
    $region15: #{tpu_custom_call.1} parent=1 // pred_check_branch
      %38 = sbr.rel (0) target = $region17
    $region16: #{tpu_custom_call.1} parent=1 // pred_region
      %39 = dma.done [#allocation7], 256
    $region17: #{tpu_custom_call.1} parent=1 // pred_fallthru
      _
    %p40 = scmp.eq.s32.totalorder 0, 0
    // Predicated region
    $region18: #{tpu_custom_call.1} parent=1 // pred_check
      %p41 = pneg %p40
    $region19: #{tpu_custom_call.1} parent=1 // pred_check_branch
      %43 = sbr.rel (%p41) target = $region21
    $region20: #{tpu_custom_call.1} parent=1 // pred_region
      %44 = vst [vmem:[#allocation2] sm:$0xff] 0.0
    $region21: #{tpu_custom_call.1} parent=1 // pred_fallthru
      _
    %v45 = vld [vmem:[#allocation3] sm:$0xff]
    %v46 = vld [vmem:[#allocation3 + $0x8] sm:$0xff]
    %v47 = vld [vmem:[#allocation6] sm:$0xff]
    %v48 = vld [vmem:[#allocation6 + $0x8] sm:$0xff]
    %v49 = vmax.f32 %v45, 0.0
    %v50 = vmax.f32 %v46, 0.0
    %v51 = vmul.f32 %v45, %v47
    %v52 = vmul.f32 %v46, %v48
    %v53 = vsub.f32 %v49, %v51
    %v54 = vsub.f32 %v50, %v52
    %v55 = vand.u32 2147483647, %v45
    %v56 = vand.u32 2147483647, %v46
    %v57 = vsub.f32 0.0, %v55
    %v58 = vsub.f32 0.0, %v56
    %v59 = vmul.f32 %v57, 1.442695
    %v60 = vpow.pop %v59
    %v61 = vmul.f32 %v58, 1.442695
    %v62 = vpow.pop %v61
    %v63 = vadd.f32 %v60, 1.0
    %v64 = vlog2.pop %v63
    %v65 = vmul.f32 %v64, 0.6931472
    %v66 = vmul.f32 -0.5, %v60
    %v67 = vadd.f32 %v66, 1.0
    %v68 = vmul.f32 %v67, %v60
    %v69 = vand.u32 2147483647, %v60
    %vm70 = vcmp.lt.f32.partialorder %v69, 0.0004427343
    %v71 = vsel %vm70, %v68, %v65
    %v72 = vadd.f32 %v62, 1.0
    %v73 = vlog2.pop %v72
    %v74 = vmul.f32 %v73, 0.6931472
    %v75 = vmul.f32 -0.5, %v62
    %v76 = vadd.f32 %v75, 1.0
    %v77 = vmul.f32 %v76, %v62
    %v78 = vand.u32 2147483647, %v62
    %vm79 = vcmp.lt.f32.partialorder %v78, 0.0004427343
    %v80 = vsel %vm79, %v77, %v74
    %v81 = vadd.f32 %v53, %v71
    %v82 = vadd.f32 %v54, %v80
    %v83 = vld [vmem:[#allocation2] sm:$0xff]
    %v84 = vadd.f32 %v81, %v82
    %v85 = vadd.f32 %v83, %v84
    %86 = vst [vmem:[#allocation2] sm:$0xff] %v85
    // Predicated region
    $region22: #{tpu_custom_call.1} parent=1 // pred_check
      %p87 = pneg %p40
    $region23: #{tpu_custom_call.1} parent=1 // pred_check_branch
      %89 = sbr.rel (%p87) target = $region25
    $region24: #{tpu_custom_call.1} parent=1 // pred_region
      %v90 = vld [vmem:[#allocation2] sm:$0xff]
      %91 = vadd.xlane.f32.xlu0 %v90
      %v92 = vpop.xlane.xlu0 %91
      %v93 = vrot.slane %v92, 4
      %v94 = vadd.f32 %v92, %v93
      %v95 = vrot.slane %v94, 2
      %v96 = vadd.f32 %v94, %v95
      %v97 = vrot.slane %v96, 1
      %v98 = vadd.f32 %v96, %v97
      %s99 = vtos %v98
      %v100 = vstv %s99
      %vm101 = vcmask 0
      %102 = vst.msk [vmem:[#allocation8] sm:$0x1] %vm101, %v100
    $region25: #{tpu_custom_call.1} parent=1 // pred_fallthru
      _
    // Predicated region
    $region26: #{tpu_custom_call.1} parent=1 // pred_check
      _
    $region27: #{tpu_custom_call.1} parent=1 // pred_check_branch
      %104 = sbr.rel (0) target = $region29
    $region28: #{tpu_custom_call.1} parent=1 // pred_region
      %s106 = ssub.s32 16, 16
      %107 = vsyncadd [#allocation5], %s106
      %s109 = sshll.u32 [#allocation8], 4
      %s110 = int_to_ptr.vmem [resolvable:$true] %s109
      %112 = dma.vmem_to_hbm [thread:$0]  %s110, 16, %s2, [#allocation5]
    $region29: #{tpu_custom_call.1} parent=1 // pred_fallthru
      _
    // Predicated region
    $region30: #{tpu_custom_call.1} parent=1 // pred_check
      _
    $region31: #{tpu_custom_call.1} parent=1 // pred_check_branch
      %114 = sbr.rel (0) target = $region33
    $region32: #{tpu_custom_call.1} parent=1 // pred_region
      %115 = dma.done [#allocation5], 16
    $region33: #{tpu_custom_call.1} parent=1 // pred_fallthru
      _
    %116 = vsyncpa [#allocation4], 1
    %117 = vsyncpa [#allocation7], 1
    %118 = vsyncpa [#allocation5], 1

</llo_original>
